<compile_context>
chip_gen: v7x
topology: tpu7x:2x2x1
jax: 0.10.0
libtpu: 0.0.40
codegen_flags: <defaults>
</compile_context>

<pallas_src>
import functools

import jax
import jax.numpy as jnp
from jax.experimental import pallas as pl
from jax.experimental.pallas import tpu as pltpu

LN_EPS = 1e-5  # nn.LayerNorm default
_MIB = 1024 * 1024


def _tpu_generation():
    """Best-effort TPU generation detection (0 = unknown)."""
    try:
        kind = jax.devices()[0].device_kind.lower()
    except Exception:
        return 0
    if "7x" in kind or "v7" in kind:
        return 7
    if "v6" in kind or "trillium" in kind:
        return 6
    if "v5" in kind:
        return 5
    return 0


def _spt_kernel(x_ref, g_ref, b_ref, w_ref, bias_ref, o_ref, *, inv_n):
    """Fused LayerNorm + Linear over one tile of tokens.

    x_ref:    (TM, patch_dim)   token tile (f32 or bf16)
    g_ref:    (1, patch_dim)    LN gamma (f32)
    b_ref:    (1, patch_dim)    LN beta  (f32)
    w_ref:    (patch_dim, dim)  Linear weight^T (f32 or bf16, cast hoisted)
    bias_ref: (1, dim)          Linear bias (f32)
    o_ref:    (TM, dim)         f32 output tile
    """
    x = x_ref[...].astype(jnp.float32)

    # Single-pass LN statistics in f32 (biased variance, as in PyTorch LN).
    s1 = jnp.sum(x, axis=-1, keepdims=True)
    s2 = jnp.sum(x * x, axis=-1, keepdims=True)
    mean = s1 * inv_n
    var = jnp.maximum(s2 * inv_n - mean * mean, 0.0)
    xn = (x - mean) * jax.lax.rsqrt(var + LN_EPS)
    xn = xn * g_ref[...] + b_ref[...]

    # Feed the MXU in the weight's dtype (bf16 on v6e/v7x). The weight itself is
    # already pre-cast in the wrapper, so there is no per-step VPU cast of the
    # full (patch_dim, dim) tile.
    y = jnp.dot(xn.astype(w_ref.dtype), w_ref[...],
                preferred_element_type=jnp.float32)
    y = y + bias_ref[...]
    o_ref[...] = y.astype(o_ref.dtype)


def _invariant_spec(shape, nbytes, single_buffer):
    """BlockSpec for a grid-invariant operand; single-buffer it when it is big."""
    index_map = lambda i: (0, 0)
    if single_buffer and nbytes > 2 * _MIB and hasattr(pl, "Buffered"):
        try:
            return pl.BlockSpec(shape, index_map, pipeline_mode=pl.Buffered(1))
        except TypeError:  # older jax without pipeline_mode kwarg
            pass
    return pl.BlockSpec(shape, index_map)


def _ln_linear_pallas(tokens, gamma, beta, w_t, bias, *, tile_m=None,
                      single_buffer_params=True, out_dtype=jnp.float32):
    """tokens: (T, patch_dim) -> (T, dim) via fused LayerNorm + Linear."""
    T, patch_dim = tokens.shape
    dim = w_t.shape[1]
    tok_bytes = tokens.dtype.itemsize
    w_bytes = w_t.dtype.itemsize
    out_bytes = jnp.dtype(out_dtype).itemsize

    # ---- generation-aware VMEM budget / scoped limit / tile_m default ----
    gen = _tpu_generation()
    if gen in (5, 6):            # 128 MiB physical VMEM
        vmem_budget, vmem_cap, default_tm = 80 * _MIB, 100 * _MIB, 1024
    elif gen == 7:               # 64 MiB per-TC VMEM: leave headroom
        vmem_budget, vmem_cap, default_tm = 40 * _MIB, 52 * _MIB, 512
    else:                        # unknown generation: conservative
        vmem_budget, vmem_cap, default_tm = 36 * _MIB, 48 * _MIB, 512
    if tile_m is None:
        tile_m = default_tm

    w_nbytes = patch_dim * dim * w_bytes
    param_bufs = 1 if (single_buffer_params and w_nbytes > 2 * _MIB
                       and hasattr(pl, "Buffered")) else 2

    def vmem_est(m):
        io = 2 * m * patch_dim * tok_bytes + 2 * m * dim * out_bytes   # double-buffered tiles
        tmp = 3 * m * (patch_dim + dim) * 4                            # f32 intermediates
        par = param_bufs * (w_nbytes + (2 * patch_dim + dim) * 4)      # invariant operands
        return io + tmp + par

    # ---- pick tile_m: big tiles for HBM roofline, shrink only if VMEM-bound ----
    sub = 16 if tok_bytes == 2 else 8               # sublane packing minimum
    tm = min(tile_m, T)
    while tm > sub and vmem_est(tm) > vmem_budget:
        tm = max(sub, tm // 2)
    if tm < T:
        tm = max(sub, (tm // sub) * sub)            # partial last block is handled by masking
    grid = (pl.cdiv(T, tm),)

    vmem_limit = int(min(vmem_cap, max(32 * _MIB, vmem_est(tm) + 8 * _MIB)))

    cost = pl.CostEstimate(
        flops=2 * T * patch_dim * dim,
        transcendentals=0,
        bytes_accessed=(T * patch_dim * tok_bytes + w_nbytes
                        + (2 * patch_dim + dim) * 4 + T * dim * out_bytes),
    )

    kernel = functools.partial(_spt_kernel, inv_n=float(1.0 / patch_dim))

    out = pl.pallas_call(
        kernel,
        out_shape=jax.ShapeDtypeStruct((T, dim), out_dtype),
        grid_spec=pltpu.PrefetchScalarGridSpec(
            num_scalar_prefetch=0,
            grid=grid,
            in_specs=[
                pl.BlockSpec((tm, patch_dim), lambda i: (i, 0)),             # token tile
                _invariant_spec((1, patch_dim), patch_dim * 4, single_buffer_params),   # gamma
                _invariant_spec((1, patch_dim), patch_dim * 4, single_buffer_params),   # beta
                _invariant_spec((patch_dim, dim), w_nbytes, single_buffer_params),      # weight^T
                _invariant_spec((1, dim), dim * 4, single_buffer_params),               # bias
            ],
            out_specs=pl.BlockSpec((tm, dim), lambda i: (i, 0)),
        ),
        compiler_params=pltpu.CompilerParams(
            dimension_semantics=("parallel",),     # rows shard across TCs on v7x
            vmem_limit_bytes=vmem_limit,
        ),
        cost_estimate=cost,
    )(tokens, gamma, beta, w_t, bias)
    return out


def spt_forward(x, params, *, patch_size, tile_m=None, mxu_dtype="auto"):
    """x: (B, C, H, W) NCHW, matching the PyTorch module interface."""
    B, C, H, W = x.shape
    p = patch_size
    hp, wp = H // p, W // p

    # NHWC so the '(p1 p2 c5)' packing keeps the feature axis minor; the whole
    # shift/stack/rearrange below is one XLA copy fusion over the 5x data.
    # TODO(synk): fold the shift/stack/patch-rearrange into the Pallas kernel by
    # assembling patches in VMEM from a once-padded NHWC image (removes the 5x HBM
    # materialization; biggest remaining lever, especially on v5e).
    xh = jnp.transpose(x, (0, 2, 3, 1))                                   # (B,H,W,C)
    shift_r = jnp.pad(xh, ((0, 0), (0, 0), (1, 0), (0, 0)))[:, :, :W, :]  # F.pad (1,-1,0,0)
    shift_l = jnp.pad(xh, ((0, 0), (0, 0), (0, 1), (0, 0)))[:, :, 1:, :]  # (-1,1,0,0)
    shift_d = jnp.pad(xh, ((0, 0), (1, 0), (0, 0), (0, 0)))[:, :H, :, :]  # (0,0,1,-1)
    shift_u = jnp.pad(xh, ((0, 0), (0, 1), (0, 0), (0, 0)))[:, 1:, :, :]  # (0,0,-1,1)

    # Shift-major, channel-minor == torch.cat along the channel dim.
    x5 = jnp.stack([xh, shift_r, shift_l, shift_d, shift_u], axis=3)      # (B,H,W,5,C)
    C5 = 5 * C
    x5 = x5.reshape(B, H, W, C5)

    # 'b (h p1) (w p2) c5 -> b (h w) (p1 p2 c5)' — c5 stays minor.
    t = x5.reshape(B, hp, p, wp, p, C5)
    t = jnp.transpose(t, (0, 1, 3, 2, 4, 5))
    patch_dim = p * p * C5
    N = hp * wp
    tokens2d = t.reshape(B * N, patch_dim)

    # bf16 MXU feed (and halved token/weight HBM traffic) on v6e / v7x.
    if mxu_dtype == "auto":
        mxu = jnp.bfloat16 if _tpu_generation() in (6, 7) else None
    else:
        mxu = mxu_dtype
    w_t = params["w_t"]
    if mxu is not None:
        tokens2d = tokens2d.astype(mxu)   # fuses into the rearrange copy
        w_t = w_t.astype(mxu)             # hoisted: cast once, not per grid step

    dim = w_t.shape[1]
    out2d = _ln_linear_pallas(
        tokens2d,
        params["ln_gamma"].reshape(1, patch_dim).astype(jnp.float32),
        params["ln_beta"].reshape(1, patch_dim).astype(jnp.float32),
        w_t,
        params["lin_bias"].reshape(1, dim).astype(jnp.float32),
        tile_m=tile_m,
    )
    return out2d.reshape(B, N, dim)


def init_params(key, *, dim, patch_size, channels):
    patch_dim = patch_size * patch_size * 5 * channels
    k_w, k_b = jax.random.split(key)
    bound = 1.0 / jnp.sqrt(patch_dim)
    # Linear weight stored pre-transposed: (patch_dim, dim)
    w_t = jax.random.uniform(k_w, (patch_dim, dim), jnp.float32, -bound, bound)
    lin_bias = jax.random.uniform(k_b, (dim,), jnp.float32, -bound, bound)
    return {
        "ln_gamma": jnp.ones((patch_dim,), jnp.float32),
        "ln_beta": jnp.zeros((patch_dim,), jnp.float32),
        "w_t": w_t,
        "lin_bias": lin_bias,
    }


if __name__ == "__main__":
    B, C, H, W = 2, 3, 16, 16
    patch_size = 4
    dim = 32

    key = jax.random.PRNGKey(0)
    k_x, k_p = jax.random.split(key)
    x = jax.random.normal(k_x, (B, C, H, W), jnp.float32)
    params = init_params(k_p, dim=dim, patch_size=patch_size, channels=C)

    fwd = jax.jit(functools.partial(spt_forward, patch_size=patch_size))
    out = fwd(x, params)
    jax.block_until_ready(out)

    # Reference in plain JAX mirroring the PyTorch NCHW path exactly.
    def ref(x, params):
        p = patch_size
        shift_r = jnp.pad(x, ((0, 0), (0, 0), (0, 0), (1, 0)))[:, :, :, :W]
        shift_l = jnp.pad(x, ((0, 0), (0, 0), (0, 0), (0, 1)))[:, :, :, 1:]
        shift_d = jnp.pad(x, ((0, 0), (0, 0), (1, 0), (0, 0)))[:, :, :H, :]
        shift_u = jnp.pad(x, ((0, 0), (0, 0), (0, 1), (0, 0)))[:, :, 1:, :]
        x5 = jnp.concatenate([x, shift_r, shift_l, shift_d, shift_u], axis=1)
        t = x5.reshape(B, 5 * C, H // p, p, W // p, p)
        t = jnp.transpose(t, (0, 2, 4, 3, 5, 1)).reshape(B, (H // p) * (W // p), -1)
        mu = jnp.mean(t, -1, keepdims=True)
        var = jnp.mean((t - mu) ** 2, -1, keepdims=True)
        tn = (t - mu) / jnp.sqrt(var + LN_EPS) * params["ln_gamma"] + params["ln_beta"]
        return tn @ params["w_t"] + params["lin_bias"]

    ref_out = ref(x, params)
    used_bf16 = _tpu_generation() in (6, 7)
    tol = 5e-2 if used_bf16 else 1e-4   # bf16 token/weight feed on v6e/v7x
    assert out.shape == (B, (H // patch_size) * (W // patch_size), dim)
    assert out.dtype == jnp.float32
    assert jnp.allclose(out, ref_out, atol=tol, rtol=tol)
    print("KERNEL_OK")
</pallas_src>

<mosaic_0001>
module attributes {stable_mosaic.version = 11 : i64} {
  func.func @_spt_kernel(%arg0: i32, %arg1: memref<32x240xf32, #tpu.memory_space<vmem>>, %arg2: memref<1x240xf32, #tpu.memory_space<vmem>>, %arg3: memref<1x240xf32, #tpu.memory_space<vmem>>, %arg4: memref<240x32xf32, #tpu.memory_space<vmem>>, %arg5: memref<1x32xf32, #tpu.memory_space<vmem>>, %arg6: memref<32x32xf32, #tpu.memory_space<vmem>>) attributes {dimension_semantics = [#tpu.dimension_semantics<parallel>], iteration_bounds = array<i64: 1>, scalar_prefetch = 0 : i64, scratch_operands = 0 : i64, tpu.core_type = #tpu.core_type<tc>, window_params = [{transform_indices = @transform_0, window_bounds = array<i64: 32, 240>}, {pipeline_mode = #tpu.pipeline_mode<synchronous>, transform_indices = @transform_1, window_bounds = array<i64: 1, 240>}, {pipeline_mode = #tpu.pipeline_mode<synchronous>, transform_indices = @transform_2, window_bounds = array<i64: 1, 240>}, {pipeline_mode = #tpu.pipeline_mode<synchronous>, transform_indices = @transform_3, window_bounds = array<i64: 240, 32>}, {pipeline_mode = #tpu.pipeline_mode<synchronous>, transform_indices = @transform_4, window_bounds = array<i64: 1, 32>}, {transform_indices = @transform_5, window_bounds = array<i64: 32, 32>}]} {
    %c0 = arith.constant 0 : index
    %c0_0 = arith.constant 0 : index
    %0 = vector.load %arg1[%c0, %c0_0] : memref<32x240xf32, #tpu.memory_space<vmem>>, vector<32x240xf32>
    %cst = arith.constant dense<0.000000e+00> : vector<32xf32>
    %1 = vector.multi_reduction <add>, %0, %cst [1] : vector<32x240xf32> to vector<32xf32>
    %2 = vector.shape_cast %1 : vector<32xf32> to vector<32x1xf32>
    %3 = arith.mulf %0, %0 : vector<32x240xf32>
    %cst_1 = arith.constant dense<0.000000e+00> : vector<32xf32>
    %4 = vector.multi_reduction <add>, %3, %cst_1 [1] : vector<32x240xf32> to vector<32xf32>
    %5 = vector.shape_cast %4 : vector<32xf32> to vector<32x1xf32>
    %cst_2 = arith.constant 0.00416666688 : f32
    %6 = vector.broadcast %cst_2 : f32 to vector<32x1xf32>
    %7 = arith.mulf %2, %6 : vector<32x1xf32>
    %cst_3 = arith.constant 0.00416666688 : f32
    %8 = vector.broadcast %cst_3 : f32 to vector<32x1xf32>
    %9 = arith.mulf %5, %8 : vector<32x1xf32>
    %10 = arith.mulf %7, %7 : vector<32x1xf32>
    %11 = arith.subf %9, %10 : vector<32x1xf32>
    %cst_4 = arith.constant 0.000000e+00 : f32
    %12 = vector.broadcast %cst_4 : f32 to vector<32x1xf32>
    %13 = arith.maximumf %11, %12 : vector<32x1xf32>
    %14 = vector.broadcast %7 : vector<32x1xf32> to vector<32x240xf32>
    %15 = arith.subf %0, %14 : vector<32x240xf32>
    %cst_5 = arith.constant 9.99999974E-6 : f32
    %16 = vector.broadcast %cst_5 : f32 to vector<32x1xf32>
    %17 = arith.addf %13, %16 : vector<32x1xf32>
    %18 = math.rsqrt %17 : vector<32x1xf32>
    %19 = vector.broadcast %18 : vector<32x1xf32> to vector<32x240xf32>
    %20 = arith.mulf %15, %19 : vector<32x240xf32>
    %c0_6 = arith.constant 0 : index
    %c0_7 = arith.constant 0 : index
    %21 = vector.load %arg2[%c0_6, %c0_7] : memref<1x240xf32, #tpu.memory_space<vmem>>, vector<1x240xf32>
    %22 = vector.broadcast %21 : vector<1x240xf32> to vector<32x240xf32>
    %23 = arith.mulf %20, %22 : vector<32x240xf32>
    %c0_8 = arith.constant 0 : index
    %c0_9 = arith.constant 0 : index
    %24 = vector.load %arg3[%c0_8, %c0_9] : memref<1x240xf32, #tpu.memory_space<vmem>>, vector<1x240xf32>
    %25 = vector.broadcast %24 : vector<1x240xf32> to vector<32x240xf32>
    %26 = arith.addf %23, %25 : vector<32x240xf32>
    %c0_10 = arith.constant 0 : index
    %c0_11 = arith.constant 0 : index
    %27 = vector.load %arg4[%c0_10, %c0_11] : memref<240x32xf32, #tpu.memory_space<vmem>>, vector<240x32xf32>
    %cst_12 = arith.constant dense<0.000000e+00> : vector<32x32xf32>
    %28 = tpu.matmul %26, %27, %cst_12 {dimension_numbers = #tpu.dot_dimension_numbers<[1], [0], [0], [1], [0, 0, 1, 1], [], []>} : vector<32x240xf32>, vector<240x32xf32>, vector<32x32xf32> -> vector<32x32xf32>
    %c0_13 = arith.constant 0 : index
    %c0_14 = arith.constant 0 : index
    %29 = vector.load %arg5[%c0_13, %c0_14] : memref<1x32xf32, #tpu.memory_space<vmem>>, vector<1x32xf32>
    %30 = vector.broadcast %29 : vector<1x32xf32> to vector<32x32xf32>
    %31 = arith.addf %28, %30 : vector<32x32xf32>
    %c0_15 = arith.constant 0 : index
    %c0_16 = arith.constant 0 : index
    %32 = vector.load %arg6[%c0_15, %c0_16] : memref<32x32xf32, #tpu.memory_space<vmem>>, vector<32x32xf32>
    tpu.vector_store %arg6[%c0_15, %c0_16], %31 {strides = array<i32>} : memref<32x32xf32, #tpu.memory_space<vmem>>, vector<32x32xf32>,
    return
  }
  func.func @transform_0(%arg0: i32) -> (i32, i32) {
    %c0_i32 = arith.constant 0 : i32
    %c0_i32_0 = arith.constant 0 : i32
    return %arg0, %c0_i32 : i32, i32
  }
  func.func @transform_1(%arg0: i32) -> (i32, i32) {
    %c0_i32 = arith.constant 0 : i32
    %c0_i32_0 = arith.constant 0 : i32
    %c0_i32_1 = arith.constant 0 : i32
    return %c0_i32, %c0_i32_0 : i32, i32
  }
  func.func @transform_2(%arg0: i32) -> (i32, i32) {
    %c0_i32 = arith.constant 0 : i32
    %c0_i32_0 = arith.constant 0 : i32
    %c0_i32_1 = arith.constant 0 : i32
    return %c0_i32, %c0_i32_0 : i32, i32
  }
  func.func @transform_3(%arg0: i32) -> (i32, i32) {
    %c0_i32 = arith.constant 0 : i32
    %c0_i32_0 = arith.constant 0 : i32
    %c0_i32_1 = arith.constant 0 : i32
    return %c0_i32, %c0_i32_0 : i32, i32
  }
  func.func @transform_4(%arg0: i32) -> (i32, i32) {
    %c0_i32 = arith.constant 0 : i32
    %c0_i32_0 = arith.constant 0 : i32
    %c0_i32_1 = arith.constant 0 : i32
    return %c0_i32, %c0_i32_0 : i32, i32
  }
  func.func @transform_5(%arg0: i32) -> (i32, i32) {
    %c0_i32 = arith.constant 0 : i32
    %c0_i32_0 = arith.constant 0 : i32
    return %arg0, %c0_i32 : i32, i32
  }
}

</mosaic_0001>

<llo_original>
// kernel: spt_forward.1
$region0: #{spt_forward.1}
  #allocation0 [shape = 'u32[]', space=smem, size = 0x4, offset = 0x4, fixed_abs, tag = 'smem constant byte address 0x4 - core index']
  #allocation1 [shape = 'u32[144,128]{1,0:T(1,128)}', space=vmem, size = 0x12000, scoped, tag = 'internal scratch']
  %s0 = inlined_call_operand.vmem [shape: f32[32,240], index: 0, kind: input, shape index: {}]
  %s1 = inlined_call_operand.vmem [shape: f32[1,240], index: 1, kind: input, shape index: {}]
  %s2 = inlined_call_operand.vmem [shape: f32[1,240], index: 2, kind: input, shape index: {}]
  %s3 = inlined_call_operand.vmem [shape: f32[240,32], index: 3, kind: input, shape index: {}]
  %s4 = inlined_call_operand.vmem [shape: f32[1,32], index: 4, kind: input, shape index: {}]
  %s5 = inlined_call_operand.hbm [shape: f32[32,32], index: 5, kind: output, shape index: {}]
  %s6 = sld [smem:[#allocation0]]
  $region30: #{spt_forward.1} parent=0
    _
  %s8 = ssub.s32 1, %s6
  %s9 = scalar_select 0, %s8, %s6
  $region1: #{spt_forward.1} parent=0
    #allocation2 [shape = 'u8[16384]{0}', space=vmem, size = 0x4000, scoped, tag = 'output window, operand 0, single buffered']
    #allocation3 [shape = 's32[1]{0}', space=sflag, size = 0x4, scoped, tag = 'scoped memory for spt_forward.1']
    %10 = vsyncpa [#allocation3], 0
    // Predicated region
    $region2: #{spt_forward.1} parent=1 // pred_check
      _
    $region3: #{spt_forward.1} parent=1 // pred_check_branch
      %12 = sbr.rel (0) target = $region5
    $region4: #{spt_forward.1} parent=1 // pred_region
      _
    $region5: #{spt_forward.1} parent=1 // pred_fallthru
      _
    // Predicated region
    $region6: #{spt_forward.1} parent=1 // pred_check
      _
    $region7: #{spt_forward.1} parent=1 // pred_check_branch
      %14 = sbr.rel (0) target = $region9
    $region8: #{spt_forward.1} parent=1 // pred_region
      _
    $region9: #{spt_forward.1} parent=1 // pred_fallthru
      _
    // Predicated region
    $region10: #{spt_forward.1} parent=1 // pred_check
      _
    $region11: #{spt_forward.1} parent=1 // pred_check_branch
      %16 = sbr.rel (0) target = $region13
    $region12: #{spt_forward.1} parent=1 // pred_region
      _
    $region13: #{spt_forward.1} parent=1 // pred_fallthru
      _
    // Predicated region
    $region14: #{spt_forward.1} parent=1 // pred_check
      _
    $region15: #{spt_forward.1} parent=1 // pred_check_branch
      %18 = sbr.rel (0) target = $region17
    $region16: #{spt_forward.1} parent=1 // pred_region
      _
    $region17: #{spt_forward.1} parent=1 // pred_fallthru
      _
    // Predicated region
    $region18: #{spt_forward.1} parent=1 // pred_check
      _
    $region19: #{spt_forward.1} parent=1 // pred_check_branch
      %20 = sbr.rel (0) target = $region21
    $region20: #{spt_forward.1} parent=1 // pred_region
      _
    $region21: #{spt_forward.1} parent=1 // pred_fallthru
      _
    %v21 = vld [vmem:[%s0] sm:$0xff]
    %v22 = vld [vmem:[%s0 + $0x8] sm:$0xff]
    %v23 = vld [vmem:[%s0 + $0x10] sm:$0xff]
    %v24 = vld [vmem:[%s0 + $0x18] sm:$0xff]
    %v25 = vld [vmem:[%s0 + $0x20] sm:$0xff]
    %v26 = vld [vmem:[%s0 + $0x28] sm:$0xff]
    %v27 = vld [vmem:[%s0 + $0x30] sm:$0xff]
    %v28 = vld [vmem:[%s0 + $0x38] sm:$0xff]
    %vm29 = vcmask 916480
    %v30 = vsel %vm29, %v22, 0.0
    %v31 = vadd.f32 %v21, %v30
    %32 = vadd.xlane.f32.xlu0 %v31
    %v33 = vpop.xlane.xlu0 %32
    %v34 = vsel %vm29, %v24, 0.0
    %v35 = vadd.f32 %v23, %v34
    %36 = vadd.xlane.f32.xlu0 %v35
    %v37 = vpop.xlane.xlu0 %36
    %v38 = vsel %vm29, %v26, 0.0
    %v39 = vadd.f32 %v25, %v38
    %40 = vadd.xlane.f32.xlu0 %v39
    %v41 = vpop.xlane.xlu0 %40
    %v42 = vsel %vm29, %v28, 0.0
    %v43 = vadd.f32 %v27, %v42
    %44 = vadd.xlane.f32.xlu0 %v43
    %v45 = vpop.xlane.xlu0 %44
    %v46 = vmul.f32 %v21, %v21
    %v47 = vmul.f32 %v22, %v22
    %v48 = vmul.f32 %v23, %v23
    %v49 = vmul.f32 %v24, %v24
    %v50 = vmul.f32 %v25, %v25
    %v51 = vmul.f32 %v26, %v26
    %v52 = vmul.f32 %v27, %v27
    %v53 = vmul.f32 %v28, %v28
    %v54 = vsel %vm29, %v47, 0.0
    %v55 = vadd.f32 %v46, %v54
    %56 = vadd.xlane.f32.xlu0 %v55
    %v57 = vpop.xlane.xlu0 %56
    %v58 = vsel %vm29, %v49, 0.0
    %v59 = vadd.f32 %v48, %v58
    %60 = vadd.xlane.f32.xlu0 %v59
    %v61 = vpop.xlane.xlu0 %60
    %v62 = vsel %vm29, %v51, 0.0
    %v63 = vadd.f32 %v50, %v62
    %64 = vadd.xlane.f32.xlu0 %v63
    %v65 = vpop.xlane.xlu0 %64
    %v66 = vsel %vm29, %v53, 0.0
    %v67 = vadd.f32 %v52, %v66
    %68 = vadd.xlane.f32.xlu0 %v67
    %v69 = vpop.xlane.xlu0 %68
    %v70 = vmul.f32 %v33, 0.004166667
    %v71 = vmul.f32 %v37, 0.004166667
    %v72 = vmul.f32 %v41, 0.004166667
    %v73 = vmul.f32 %v45, 0.004166667
    %v74 = vmul.f32 %v57, 0.004166667
    %v75 = vmul.f32 %v61, 0.004166667
    %v76 = vmul.f32 %v65, 0.004166667
    %v77 = vmul.f32 %v69, 0.004166667
    %v78 = vmul.f32 %v70, %v70
    %v79 = vmul.f32 %v71, %v71
    %v80 = vmul.f32 %v72, %v72
    %v81 = vmul.f32 %v73, %v73
    %v82 = vsub.f32 %v74, %v78
    %v83 = vsub.f32 %v75, %v79
    %v84 = vsub.f32 %v76, %v80
    %v85 = vsub.f32 %v77, %v81
    %v86 = vmax.f32 %v82, 0.0
    %v87 = vmax.f32 %v83, 0.0
    %v88 = vmax.f32 %v84, 0.0
    %v89 = vmax.f32 %v85, 0.0
    %v90 = vsub.f32 %v21, %v70
    %v91 = vsub.f32 %v22, %v70
    %v92 = vsub.f32 %v23, %v71
    %v93 = vsub.f32 %v24, %v71
    %v94 = vsub.f32 %v25, %v72
    %v95 = vsub.f32 %v26, %v72
    %v96 = vsub.f32 %v27, %v73
    %v97 = vsub.f32 %v28, %v73
    %v98 = vadd.f32 %v86, 1e-05
    %v99 = vadd.f32 %v87, 1e-05
    %v100 = vadd.f32 %v88, 1e-05
    %v101 = vadd.f32 %v89, 1e-05
    %v102 = vrsqrt.pop %v98
    %v103 = vrsqrt.pop %v99
    %v104 = vrsqrt.pop %v100
    %v105 = vrsqrt.pop %v101
    %v106 = vmul.f32 %v90, %v102
    %v107 = vmul.f32 %v91, %v102
    %v108 = vmul.f32 %v92, %v103
    %v109 = vmul.f32 %v93, %v103
    %v110 = vmul.f32 %v94, %v104
    %v111 = vmul.f32 %v95, %v104
    %v112 = vmul.f32 %v96, %v105
    %v113 = vmul.f32 %v97, %v105
    %v114 = vld [vmem:[%s1] sm:$0x3]
    %v116 = vlaneseq
    %v117 = vshrl.u32 %v116, 7
    %v118 = vsub.s32 0, %v117
    %v119 = vrot.slane %v114, %v118
    %v120 = vlaneseq
    %v121 = vshrl.u32 %v120, 7
    %v122 = vsub.s32 1, %v121
    %v123 = vrot.slane %v114, %v122
    %v126 = vmul.f32 %v106, %v119
    %v127 = vmul.f32 %v107, %v123
    %v128 = vmul.f32 %v108, %v119
    %v129 = vmul.f32 %v109, %v123
    %v130 = vmul.f32 %v110, %v119
    %v131 = vmul.f32 %v111, %v123
    %v132 = vmul.f32 %v112, %v119
    %v133 = vmul.f32 %v113, %v123
    %v134 = vld [vmem:[%s2] sm:$0x3]
    %v136 = vlaneseq
    %v137 = vshrl.u32 %v136, 7
    %v138 = vsub.s32 0, %v137
    %v139 = vrot.slane %v134, %v138
    %v140 = vlaneseq
    %v141 = vshrl.u32 %v140, 7
    %v142 = vsub.s32 1, %v141
    %v143 = vrot.slane %v134, %v142
    %v146 = vadd.f32 %v126, %v139
    %v147 = vadd.f32 %v127, %v143
    %v148 = vadd.f32 %v128, %v139
    %v149 = vadd.f32 %v129, %v143
    %v150 = vadd.f32 %v130, %v139
    %v151 = vadd.f32 %v131, %v143
    %v152 = vadd.f32 %v132, %v139
    %v153 = vadd.f32 %v133, %v143
    %v154 = vld [vmem:[%s3] sm:$0xff]
    %v155 = vld [vmem:[%s3 + $0x8] sm:$0xff]
    %v156 = vld [vmem:[%s3 + $0x10] sm:$0xff]
    %v157 = vld [vmem:[%s3 + $0x18] sm:$0xff]
    %v158 = vld [vmem:[%s3 + $0x20] sm:$0xff]
    %v159 = vld [vmem:[%s3 + $0x28] sm:$0xff]
    %v160 = vld [vmem:[%s3 + $0x30] sm:$0xff]
    %v161 = vld [vmem:[%s3 + $0x38] sm:$0xff]
    %v162 = vld [vmem:[%s3 + $0x40] sm:$0xff]
    %v163 = vld [vmem:[%s3 + $0x48] sm:$0xff]
    %v164 = vld [vmem:[%s3 + $0x50] sm:$0xff]
    %v165 = vld [vmem:[%s3 + $0x58] sm:$0xff]
    %v166 = vld [vmem:[%s3 + $0x60] sm:$0xff]
    %v167 = vld [vmem:[%s3 + $0x68] sm:$0xff]
    %v168 = vld [vmem:[%s3 + $0x70] sm:$0xff]
    %v169 = vld [vmem:[%s3 + $0x78] sm:$0xff]
    %v170 = vld [vmem:[%s3 + $0x80] sm:$0xff]
    %v171 = vld [vmem:[%s3 + $0x88] sm:$0xff]
    %v172 = vld [vmem:[%s3 + $0x90] sm:$0xff]
    %v173 = vld [vmem:[%s3 + $0x98] sm:$0xff]
    %v174 = vld [vmem:[%s3 + $0xa0] sm:$0xff]
    %v175 = vld [vmem:[%s3 + $0xa8] sm:$0xff]
    %v176 = vld [vmem:[%s3 + $0xb0] sm:$0xff]
    %v177 = vld [vmem:[%s3 + $0xb8] sm:$0xff]
    %v178 = vld [vmem:[%s3 + $0xc0] sm:$0xff]
    %v179 = vld [vmem:[%s3 + $0xc8] sm:$0xff]
    %v180 = vld [vmem:[%s3 + $0xd0] sm:$0xff]
    %v181 = vld [vmem:[%s3 + $0xd8] sm:$0xff]
    %v182 = vld [vmem:[%s3 + $0xe0] sm:$0xff]
    %v183 = vld [vmem:[%s3 + $0xe8] sm:$0xff]
    %v184 = vld [vmem:[%s4] sm:$0x1]
    %v186 = vlaneseq
    %v187 = vshrl.u32 %v186, 7
    %v188 = vsub.s32 0, %v187
    %v189 = vrot.slane %v184, %v188
    %v192 = vsel %vm29, %v147, 0
    %v195 = vsel %vm29, %v149, 0
    %v198 = vsel %vm29, %v151, 0
    %v201 = vsel %vm29, %v153, 0
    %203 = vmatprep.subr.mxu0 0.0
    %204 = vmatpush1.msra.mxu0 %v154
    %205 = vmatprep.subr.mxu0 0.0
    %206 = vmatpush1.msra.mxu0 %v155
    %207 = vmatprep.subr.mxu0 0.0
    %208 = vmatpush1.msra.mxu0 %v156
    %209 = vmatprep.subr.mxu0 0.0
    %210 = vmatpush1.msra.mxu0 %v157
    %211 = vmatprep.subr.mxu0 0.0
    %212 = vmatpush1.msra.mxu0 %v158
    %213 = vmatprep.subr.mxu0 0.0
    %214 = vmatpush1.msra.mxu0 %v159
    %215 = vmatprep.subr.mxu0 0.0
    %216 = vmatpush1.msra.mxu0 %v160
    %217 = vmatprep.subr.mxu0 0.0
    %218 = vmatpush1.msra.mxu0 %v161
    %219 = vmatprep.subr.mxu0 0.0
    %220 = vmatpush1.msra.mxu0 %v162
    %221 = vmatprep.subr.mxu0 0.0
    %222 = vmatpush1.msra.mxu0 %v163
    %223 = vmatprep.subr.mxu0 0.0
    %224 = vmatpush1.msra.mxu0 %v164
    %225 = vmatprep.subr.mxu0 0.0
    %226 = vmatpush1.msra.mxu0 %v165
    %227 = vmatprep.subr.mxu0 0.0
    %228 = vmatpush1.msra.mxu0 %v166
    %229 = vmatprep.subr.mxu0 0.0
    %230 = vmatpush1.msra.mxu0 %v167
    %231 = vmatprep.subr.mxu0 0.0
    %232 = vmatpush1.msra.mxu0 %v168
    %233 = vmatprep.subr.mxu0 0.0
    %234 = vmatpush1.msra.mxu0 %v169
    %235 = vmatprep.subr.mxu0 0.0
    %236 = vmatpush1.msra.mxu0 %v170
    %237 = vmatprep.subr.mxu0 0.0
    %238 = vmatpush1.msra.mxu0 %v171
    %239 = vmatprep.subr.mxu0 0.0
    %240 = vmatpush1.msra.mxu0 %v172
    %241 = vmatprep.subr.mxu0 0.0
    %242 = vmatpush1.msra.mxu0 %v173
    %243 = vmatprep.subr.mxu0 0.0
    %244 = vmatpush1.msra.mxu0 %v174
    %245 = vmatprep.subr.mxu0 0.0
    %246 = vmatpush1.msra.mxu0 %v175
    %247 = vmatprep.subr.mxu0 0.0
    %248 = vmatpush1.msra.mxu0 %v176
    %249 = vmatprep.subr.mxu0 0.0
    %250 = vmatpush1.msra.mxu0 %v177
    %251 = vmatprep.subr.mxu0 0.0
    %252 = vmatpush1.msra.mxu0 %v178
    %253 = vmatprep.subr.mxu0 0.0
    %254 = vmatpush1.msra.mxu0 %v179
    %255 = vmatprep.subr.mxu0 0.0
    %256 = vmatpush1.msra.mxu0 %v180
    %257 = vmatprep.subr.mxu0 0.0
    %258 = vmatpush1.msra.mxu0 %v181
    %259 = vmatprep.subr.mxu0 0.0
    %260 = vmatpush1.msra.mxu0 %v182
    %261 = vmatprep.subr.mxu0 0.0
    %262 = vmatpush1.msra.mxu0 %v183
    %263 = vmatprep.subr.mxu0 0.0
    %264 = vmatpush1.msra.mxu0 0.0
    %265 = vmatprep.subr.mxu0 0.0
    %266 = vmatpush1.msra.mxu0 0.0
    %267 = vmatprep.mubr.f32.mxu0 %v192
    %268 = vmatmul.mubr.f32.gmra.mrb[0].mxu0 %v146
    %v269 = vpop.f32.mrb[0].mxu0
    %v270 = vadd.f32 %v189, %v269
    %v271 = vpop.f32.mrb[0].mxu0
    %272 = vmatprep.mubr.f32.mxu0 %v195
    %273 = vmatmul.mubr.f32.gmra.mrb[0].mxu0 %v148
    %v274 = vpop.f32.mrb[0].mxu0
    %v275 = vadd.f32 %v189, %v274
    %v276 = vpop.f32.mrb[0].mxu0
    %277 = vmatprep.mubr.f32.mxu0 %v198
    %278 = vmatmul.mubr.f32.gmra.mrb[0].mxu0 %v150
    %v279 = vpop.f32.mrb[0].mxu0
    %v280 = vadd.f32 %v189, %v279
    %v281 = vpop.f32.mrb[0].mxu0
    %282 = vmatprep.mubr.f32.mxu0 %v201
    %283 = vmatmul.mubr.f32.gmra.mrb[0].mxu0 %v152
    %v284 = vpop.f32.mrb[0].mxu0
    %v285 = vadd.f32 %v189, %v284
    %v286 = vpop.f32.mrb[0].mxu0
    %287 = vdwg.mxu0
    %vm288 = vcmask 261120
    %289 = vst.msk [vmem:[#allocation2] sm:$0xff] %vm288, %v270
    %290 = vst.msk [vmem:[#allocation2 + $0x8] sm:$0xff] %vm288, %v275
    %291 = vst.msk [vmem:[#allocation2 + $0x10] sm:$0xff] %vm288, %v280
    %292 = vst.msk [vmem:[#allocation2 + $0x18] sm:$0xff] %vm288, %v285
    // Predicated region
    $region22: #{spt_forward.1} parent=1 // pred_check
      _
    $region23: #{spt_forward.1} parent=1 // pred_check_branch
      %294 = sbr.rel (0) target = $region25
    $region24: #{spt_forward.1} parent=1 // pred_region
      %s296 = ssub.s32 512, 512
      %297 = vsyncadd [#allocation3], %s296
      %s298 = sshll.u32 [#allocation2], 4
      %s299 = int_to_ptr.vmem [resolvable:$true] %s298
      %304 = dma.vmem_to_hbm [thread:$0]  %s299, 512, %s5, [#allocation3], 128, 128, 8
    $region25: #{spt_forward.1} parent=1 // pred_fallthru
      _
    // Predicated region
    $region26: #{spt_forward.1} parent=1 // pred_check
      _
    $region27: #{spt_forward.1} parent=1 // pred_check_branch
      %306 = sbr.rel (0) target = $region29
    $region28: #{spt_forward.1} parent=1 // pred_region
      %307 = dma.done [#allocation3], 512
    $region29: #{spt_forward.1} parent=1 // pred_fallthru
      _
    %308 = vsyncpa [#allocation3], 1

</llo_original>
